<compile_context>
chip_gen: v5e
topology: v5e:2x2
jax: 0.10.0
libtpu: 0.0.40
codegen_flags: <defaults>
</compile_context>

<pallas_src>
import jax
import jax.numpy as jnp
from jax.experimental import pallas as pl
from jax.experimental.pallas import tpu as pltpu


def _grad_update0_kernel(scale_ref, x_ref, xpred_ref, xobs_ref, mask_ref, out_ref):
    # scale_ref: (1,) f32 in SMEM (scalar prefetch); others: (tr, tl) VMEM tiles.
    x = x_ref[...]
    xpred = xpred_ref[...]
    xobs = xobs_ref[...]
    mask = mask_ref[...]

    # Compute_Grad, GradType == 0 (subgradient of prior + masked obs term).
    # TODO(synk): Compute_Grad.py source not shipped with the module; this is
    # the GradType==0 subgradient variant: grad = (xpred - x) + mask*(x - xobs).
    grad = (xpred - x) + mask * (x - xobs)

    # gradNet: hard-coded 0.1 * I 1x1 conv  ==  VPU scale (no MXU involved).
    out_ref[...] = (scale_ref[0] * grad).astype(out_ref.dtype)


def _pick_tile(total, base, cap):
    """Largest multiple of `base` dividing `total`, capped at `cap`; or full."""
    if total <= cap:
        return total
    t = (cap // base) * base
    while t >= base:
        if total % t == 0:
            return t
        t -= base
    return total  # no aligned divisor: use full extent (always legal)


def model_grad_update0_forward(x, xpred, xobs, mask, scale=0.1):
    """x/xpred/xobs/mask: (N, C, H, W).  Returns gradNet(Compute_Grad(...))."""
    N, C, H, W = x.shape
    R, HW = N * C, H * W
    dtype = x.dtype

    # glue: flatten to a single lane-dense 2-D view (no data movement)
    xf = x.reshape(R, HW)
    xpf = xpred.reshape(R, HW)
    xof = xobs.reshape(R, HW)
    mf = mask.reshape(R, HW)

    # Tile: full extent for small problems (single grid step); for large
    # inputs keep lane tiles a big multiple of 128 and row tiles a multiple
    # of 8 so loads/stores stay unmasked and VMEM stays bounded
    # (~5 streams x 2 buffers x tr x tl x 4 B).
    tl = _pick_tile(HW, 128, 4096)
    tr = _pick_tile(R, 8, 512)
    grid = (R // tr, HW // tl)

    blk = pl.BlockSpec((tr, tl), lambda i, j, s: (i, j))
    scale_arr = jnp.asarray([scale], dtype=jnp.float32)

    out = pl.pallas_call(
        _grad_update0_kernel,
        out_shape=jax.ShapeDtypeStruct((R, HW), dtype),
        grid_spec=pltpu.PrefetchScalarGridSpec(
            num_scalar_prefetch=1,
            grid=grid,
            in_specs=[blk, blk, blk, blk],
            out_specs=blk,
        ),
        compiler_params=pltpu.CompilerParams(
            dimension_semantics=("parallel", "parallel")),
    )(scale_arr, xf, xpf, xof, mf)

    return out.reshape(N, C, H, W)


def _reference(x, xpred, xobs, mask, scale=0.1):
    grad = (xpred - x) + mask * (x - xobs)
    return scale * grad


if __name__ == "__main__":
    N, C, H, W = 2, 4, 16, 16  # ShapeData = (C, H, W) -> len == 3 branch

    key = jax.random.PRNGKey(0)
    k1, k2, k3, k4 = jax.random.split(key, 4)
    x = jax.random.normal(k1, (N, C, H, W), dtype=jnp.float32)
    xpred = jax.random.normal(k2, (N, C, H, W), dtype=jnp.float32)
    xobs = jax.random.normal(k3, (N, C, H, W), dtype=jnp.float32)
    mask = (jax.random.uniform(k4, (N, C, H, W)) > 0.5).astype(jnp.float32)

    out = model_grad_update0_forward(x, xpred, xobs, mask, scale=0.1)
    out = jax.block_until_ready(out)

    ref = _reference(x, xpred, xobs, mask, scale=0.1)
    assert out.shape == (N, C, H, W)
    assert out.dtype == x.dtype
    assert jnp.allclose(out, ref, atol=1e-6, rtol=1e-6), "mismatch vs reference"

    print("KERNEL_OK")
</pallas_src>

<mosaic_0001>
module attributes {stable_mosaic.version = 11 : i64} {
  func.func @_grad_update0_kernel(%arg0: i32, %arg1: i32, %arg2: memref<1xf32, #tpu.memory_space<smem>>, %arg3: memref<8x256xf32, #tpu.memory_space<vmem>>, %arg4: memref<8x256xf32, #tpu.memory_space<vmem>>, %arg5: memref<8x256xf32, #tpu.memory_space<vmem>>, %arg6: memref<8x256xf32, #tpu.memory_space<vmem>>, %arg7: memref<8x256xf32, #tpu.memory_space<vmem>>) attributes {dimension_semantics = [#tpu.dimension_semantics<parallel>, #tpu.dimension_semantics<parallel>], iteration_bounds = array<i64: 1, 1>, scalar_prefetch = 1 : i64, scratch_operands = 0 : i64, tpu.core_type = #tpu.core_type<tc>, window_params = [{transform_indices = @transform_0, window_bounds = array<i64: 8, 256>}, {transform_indices = @transform_1, window_bounds = array<i64: 8, 256>}, {transform_indices = @transform_2, window_bounds = array<i64: 8, 256>}, {transform_indices = @transform_3, window_bounds = array<i64: 8, 256>}, {transform_indices = @transform_4, window_bounds = array<i64: 8, 256>}]} {
    %c0 = arith.constant 0 : index
    %c0_0 = arith.constant 0 : index
    %0 = vector.load %arg3[%c0, %c0_0] : memref<8x256xf32, #tpu.memory_space<vmem>>, vector<8x256xf32>
    %c0_1 = arith.constant 0 : index
    %c0_2 = arith.constant 0 : index
    %1 = vector.load %arg4[%c0_1, %c0_2] : memref<8x256xf32, #tpu.memory_space<vmem>>, vector<8x256xf32>
    %c0_3 = arith.constant 0 : index
    %c0_4 = arith.constant 0 : index
    %2 = vector.load %arg5[%c0_3, %c0_4] : memref<8x256xf32, #tpu.memory_space<vmem>>, vector<8x256xf32>
    %c0_5 = arith.constant 0 : index
    %c0_6 = arith.constant 0 : index
    %3 = vector.load %arg6[%c0_5, %c0_6] : memref<8x256xf32, #tpu.memory_space<vmem>>, vector<8x256xf32>
    %4 = arith.subf %1, %0 : vector<8x256xf32>
    %5 = arith.subf %0, %2 : vector<8x256xf32>
    %6 = arith.mulf %3, %5 : vector<8x256xf32>
    %7 = arith.addf %4, %6 : vector<8x256xf32>
    %c0_7 = arith.constant 0 : index
    %8 = memref.load %arg2[%c0_7] : memref<1xf32, #tpu.memory_space<smem>>
    %9 = vector.broadcast %8 : f32 to vector<8x256xf32>
    %10 = arith.mulf %9, %7 : vector<8x256xf32>
    %c0_8 = arith.constant 0 : index
    %c0_9 = arith.constant 0 : index
    %11 = vector.load %arg7[%c0_8, %c0_9] : memref<8x256xf32, #tpu.memory_space<vmem>>, vector<8x256xf32>
    tpu.vector_store %arg7[%c0_8, %c0_9], %10 {strides = array<i32>} : memref<8x256xf32, #tpu.memory_space<vmem>>, vector<8x256xf32>,
    return
  }
  func.func @transform_0(%arg0: i32, %arg1: i32, %arg2: memref<1xf32, #tpu.memory_space<smem>>) -> (i32, i32) {
    %c0_i32 = arith.constant 0 : i32
    return %arg0, %arg1 : i32, i32
  }
  func.func @transform_1(%arg0: i32, %arg1: i32, %arg2: memref<1xf32, #tpu.memory_space<smem>>) -> (i32, i32) {
    %c0_i32 = arith.constant 0 : i32
    return %arg0, %arg1 : i32, i32
  }
  func.func @transform_2(%arg0: i32, %arg1: i32, %arg2: memref<1xf32, #tpu.memory_space<smem>>) -> (i32, i32) {
    %c0_i32 = arith.constant 0 : i32
    return %arg0, %arg1 : i32, i32
  }
  func.func @transform_3(%arg0: i32, %arg1: i32, %arg2: memref<1xf32, #tpu.memory_space<smem>>) -> (i32, i32) {
    %c0_i32 = arith.constant 0 : i32
    return %arg0, %arg1 : i32, i32
  }
  func.func @transform_4(%arg0: i32, %arg1: i32, %arg2: memref<1xf32, #tpu.memory_space<smem>>) -> (i32, i32) {
    %c0_i32 = arith.constant 0 : i32
    return %arg0, %arg1 : i32, i32
  }
}

</mosaic_0001>

<llo_original>
// kernel: tpu_custom_call.1
$region0: #{tpu_custom_call.1}
  #allocation0 [shape = 'u32[]', space=smem, size = 0x4, offset = 0x4, fixed_abs, tag = 'smem constant byte address 0x4 - core index']
  #allocation1 [shape = 'u32[72,128]{1,0:T(1,128)}', space=vmem, size = 0x9000, scoped, tag = 'internal scratch']
  #allocation2 [shape = 's32[1]{0}', space=sflag, size = 0x4, scoped, tag = 'scoped memory for tpu_custom_call.1']
  #allocation3 [shape = 'f32[1]{0:T(128)S(6)}', space=smem, size = 0x200, scoped, tag = 'prefetched SMEM operand 0']
  %s0 = inlined_call_operand.<no memory space> [shape: f32[1], index: 0, kind: input, shape index: {}]
  %s1 = inlined_call_operand.hbm [shape: f32[8,256], index: 1, kind: input, shape index: {}]
  %s2 = inlined_call_operand.hbm [shape: f32[8,256], index: 2, kind: input, shape index: {}]
  %s3 = inlined_call_operand.hbm [shape: f32[8,256], index: 3, kind: input, shape index: {}]
  %s4 = inlined_call_operand.hbm [shape: f32[8,256], index: 4, kind: input, shape index: {}]
  %s5 = inlined_call_operand.hbm [shape: f32[8,256], index: 5, kind: output, shape index: {}]
  %s6 = sld [smem:[#allocation0]]
  $region42: #{tpu_custom_call.1} parent=0
    _
  %s8 = ssub.s32 1, %s6
  %s9 = scalar_select 0, %s8, %s6
  %10 = sst [smem:[#allocation3]] %s0
  $region1: #{tpu_custom_call.1} parent=0
    #allocation4 [shape = 'u8[8192]{0}', space=vmem, size = 0x2000, scoped, tag = 'input window, operand 1, single buffered']
    #allocation5 [shape = 's32[1]{0}', space=sflag, size = 0x4, scoped, tag = 'scoped memory for tpu_custom_call.1']
    #allocation6 [shape = 's32[1]{0}', space=sflag, size = 0x4, scoped, tag = 'scoped memory for tpu_custom_call.1']
    #allocation7 [shape = 'u8[8192]{0}', space=vmem, size = 0x2000, scoped, tag = 'input window, operand 2, single buffered']
    #allocation8 [shape = 's32[1]{0}', space=sflag, size = 0x4, scoped, tag = 'scoped memory for tpu_custom_call.1']
    #allocation9 [shape = 'u8[8192]{0}', space=vmem, size = 0x2000, scoped, tag = 'input window, operand 3, single buffered']
    #allocation10 [shape = 'u8[8192]{0}', space=vmem, size = 0x2000, scoped, tag = 'input window, operand 4, single buffered']
    #allocation11 [shape = 's32[1]{0}', space=sflag, size = 0x4, scoped, tag = 'scoped memory for tpu_custom_call.1']
    #allocation12 [shape = 'u8[8192]{0}', space=vmem, size = 0x2000, scoped, tag = 'output window, operand 0, single buffered']
    %11 = vsyncpa [#allocation5], 0
    %12 = vsyncpa [#allocation8], 0
    %13 = vsyncpa [#allocation11], 0
    %14 = vsyncpa [#allocation6], 0
    // Predicated region
    $region2: #{tpu_custom_call.1} parent=1 // pred_check
      _
    $region3: #{tpu_custom_call.1} parent=1 // pred_check_branch
      %16 = sbr.rel (0) target = $region5
    $region4: #{tpu_custom_call.1} parent=1 // pred_region
      %18 = vsyncadd [#allocation5], 0
      %s20 = sshll.u32 %s1, 4
      %s21 = int_to_ptr.hbm [resolvable:$true] %s20
      %s22 = sshll.u32 [#allocation4], 4
      %s23 = int_to_ptr.vmem [resolvable:$true] %s22
      %25 = dma.hbm_to_vmem [thread:$0]  %s21, 256, %s23, [#allocation5]
    $region5: #{tpu_custom_call.1} parent=1 // pred_fallthru
      _
    // Predicated region
    $region6: #{tpu_custom_call.1} parent=1 // pred_check
      _
    $region7: #{tpu_custom_call.1} parent=1 // pred_check_branch
      %27 = sbr.rel (0) target = $region9
    $region8: #{tpu_custom_call.1} parent=1 // pred_region
      %29 = vsyncadd [#allocation8], 0
      %s31 = sshll.u32 %s2, 4
      %s32 = int_to_ptr.hbm [resolvable:$true] %s31
      %s33 = sshll.u32 [#allocation7], 4
      %s34 = int_to_ptr.vmem [resolvable:$true] %s33
      %36 = dma.hbm_to_vmem [thread:$0]  %s32, 256, %s34, [#allocation8]
    $region9: #{tpu_custom_call.1} parent=1 // pred_fallthru
      _
    // Predicated region
    $region10: #{tpu_custom_call.1} parent=1 // pred_check
      _
    $region11: #{tpu_custom_call.1} parent=1 // pred_check_branch
      %38 = sbr.rel (0) target = $region13
    $region12: #{tpu_custom_call.1} parent=1 // pred_region
      %40 = vsyncadd [#allocation8], 0
      %s42 = sshll.u32 %s3, 4
      %s43 = int_to_ptr.hbm [resolvable:$true] %s42
      %s44 = sshll.u32 [#allocation9], 4
      %s45 = int_to_ptr.vmem [resolvable:$true] %s44
      %47 = dma.hbm_to_vmem [thread:$0]  %s43, 256, %s45, [#allocation8]
    $region13: #{tpu_custom_call.1} parent=1 // pred_fallthru
      _
    // Predicated region
    $region14: #{tpu_custom_call.1} parent=1 // pred_check
      _
    $region15: #{tpu_custom_call.1} parent=1 // pred_check_branch
      %49 = sbr.rel (0) target = $region17
    $region16: #{tpu_custom_call.1} parent=1 // pred_region
      %51 = vsyncadd [#allocation11], 0
      %s53 = sshll.u32 %s4, 4
      %s54 = int_to_ptr.hbm [resolvable:$true] %s53
      %s55 = sshll.u32 [#allocation10], 4
      %s56 = int_to_ptr.vmem [resolvable:$true] %s55
      %58 = dma.hbm_to_vmem [thread:$0]  %s54, 256, %s56, [#allocation11]
    $region17: #{tpu_custom_call.1} parent=1 // pred_fallthru
      _
    // Predicated region
    $region18: #{tpu_custom_call.1} parent=1 // pred_check
      _
    $region19: #{tpu_custom_call.1} parent=1 // pred_check_branch
      %60 = sbr.rel (0) target = $region21
    $region20: #{tpu_custom_call.1} parent=1 // pred_region
      %62 = dma.done [#allocation5], 256
    $region21: #{tpu_custom_call.1} parent=1 // pred_fallthru
      _
    // Predicated region
    $region22: #{tpu_custom_call.1} parent=1 // pred_check
      _
    $region23: #{tpu_custom_call.1} parent=1 // pred_check_branch
      %64 = sbr.rel (0) target = $region25
    $region24: #{tpu_custom_call.1} parent=1 // pred_region
      %66 = dma.done [#allocation8], 256
    $region25: #{tpu_custom_call.1} parent=1 // pred_fallthru
      _
    // Predicated region
    $region26: #{tpu_custom_call.1} parent=1 // pred_check
      _
    $region27: #{tpu_custom_call.1} parent=1 // pred_check_branch
      %68 = sbr.rel (0) target = $region29
    $region28: #{tpu_custom_call.1} parent=1 // pred_region
      %70 = dma.done [#allocation8], 256
    $region29: #{tpu_custom_call.1} parent=1 // pred_fallthru
      _
    // Predicated region
    $region30: #{tpu_custom_call.1} parent=1 // pred_check
      _
    $region31: #{tpu_custom_call.1} parent=1 // pred_check_branch
      %72 = sbr.rel (0) target = $region33
    $region32: #{tpu_custom_call.1} parent=1 // pred_region
      %74 = dma.done [#allocation11], 256
    $region33: #{tpu_custom_call.1} parent=1 // pred_fallthru
      _
    %v75 = vld [vmem:[#allocation4] sm:$0xff]
    %v76 = vld [vmem:[#allocation4 + $0x8] sm:$0xff]
    %v77 = vld [vmem:[#allocation7] sm:$0xff]
    %v78 = vld [vmem:[#allocation7 + $0x8] sm:$0xff]
    %v79 = vld [vmem:[#allocation9] sm:$0xff]
    %v80 = vld [vmem:[#allocation9 + $0x8] sm:$0xff]
    %v81 = vld [vmem:[#allocation10] sm:$0xff]
    %v82 = vld [vmem:[#allocation10 + $0x8] sm:$0xff]
    %v83 = vsub.f32 %v77, %v75
    %v84 = vsub.f32 %v78, %v76
    %v85 = vsub.f32 %v75, %v79
    %v86 = vsub.f32 %v76, %v80
    %v87 = vmul.f32 %v81, %v85
    %v88 = vmul.f32 %v82, %v86
    %v89 = vadd.f32 %v83, %v87
    %v90 = vadd.f32 %v84, %v88
    %s91 = sld [smem:[#allocation3]]
    %v92 = vstv %s91
    %v93 = vmul.f32 %v92, %v89
    %v94 = vmul.f32 %v92, %v90
    %95 = vst [vmem:[#allocation12] sm:$0xff] %v93
    %96 = vst [vmem:[#allocation12 + $0x8] sm:$0xff] %v94
    // Predicated region
    $region34: #{tpu_custom_call.1} parent=1 // pred_check
      _
    $region35: #{tpu_custom_call.1} parent=1 // pred_check_branch
      %98 = sbr.rel (0) target = $region37
    $region36: #{tpu_custom_call.1} parent=1 // pred_region
      %100 = vsyncadd [#allocation6], 0
      %s102 = sshll.u32 [#allocation12], 4
      %s103 = int_to_ptr.vmem [resolvable:$true] %s102
      %s104 = sshll.u32 %s5, 4
      %s105 = int_to_ptr.hbm [resolvable:$true] %s104
      %107 = dma.vmem_to_hbm [thread:$0]  %s103, 256, %s105, [#allocation6]
    $region37: #{tpu_custom_call.1} parent=1 // pred_fallthru
      _
    // Predicated region
    $region38: #{tpu_custom_call.1} parent=1 // pred_check
      _
    $region39: #{tpu_custom_call.1} parent=1 // pred_check_branch
      %109 = sbr.rel (0) target = $region41
    $region40: #{tpu_custom_call.1} parent=1 // pred_region
      %111 = dma.done [#allocation6], 256
    $region41: #{tpu_custom_call.1} parent=1 // pred_fallthru
      _
    %112 = vsyncpa [#allocation5], 1
    %113 = vsyncpa [#allocation8], 1
    %114 = vsyncpa [#allocation11], 1
    %115 = vsyncpa [#allocation6], 1

</llo_original>
